<compile_context>
chip_gen: v6e
topology: v6e:2x2x1
jax: 0.10.0
libtpu: 0.0.40
codegen_flags: <defaults>
</compile_context>

<pallas_src>
import jax
import jax.numpy as jnp
from jax.experimental import pallas as pl
from jax.experimental.pallas import tpu as pltpu


def _round_up(x: int, m: int) -> int:
    return ((x + m - 1) // m) * m


def _choose_tile(total: int, cap: int, granule: int) -> int:
    """Largest multiple of `granule` that divides `total` and is <= cap.

    `total` is always a multiple of `granule` by construction, so at worst
    this returns `granule` itself (always a valid tile).
    """
    if total <= cap:
        return total
    best = granule
    t = granule
    while t <= cap:
        if total % t == 0:
            best = t
        t += granule
    return best


def _tile_config():
    """Per-generation (tm_cap, tn_cap, tk_cap, vmem_budget, vmem_limit)."""
    kind = ""
    try:
        kind = jax.devices()[0].device_kind.lower()
    except Exception:  # pragma: no cover - defensive; fall back to safe caps
        pass
    if "v7" in kind or "7x" in kind:
        # v7x: ~310 flop/byte needed; 1024x1024 tiles (AI=512) already exceed
        # it and the footprint stays inside the 32 MiB scoped default.
        return 1024, 1024, 1024, 24 << 20, None
    if "v6" in kind:
        # v6e: ~680 flop/byte needed -> bigger tiles; 128 MiB physical VMEM,
        # so raising the scoped limit to 64 MiB is safe.
        return 1024, 2048, 512, 48 << 20, 64 << 20
    # v5e / unknown: already near its roofline at 512x512; stay well under
    # the 16 MiB scoped-VMEM default.
    return 512, 512, 1024, 12 << 20, None


def _vmem_footprint(tm, tk, tn, x_bytes_per_elem):
    """Approximate double-buffered VMEM bytes for one grid step."""
    return 2 * (tm * tk * x_bytes_per_elem   # X tile
                + tk * tn * 2                # W tile (bf16)
                + tm * tn * 4                # O tile (f32, resident)
                + tn * 4)                    # bias tile


# ----------------------------- kernels --------------------------------------

def _mylinear_kernel_single_k(x_ref, w_ref, b_ref, o_ref):
    """Whole K fits in one tile: no reduction axis, no accumulator."""
    x = x_ref[...].astype(jnp.bfloat16)          # no-op if already bf16
    acc = jnp.dot(x, w_ref[...], preferred_element_type=jnp.float32)
    o_ref[...] = jnp.maximum(acc + b_ref[...], 0.0).astype(o_ref.dtype)


def _mylinear_kernel_multi_k(x_ref, w_ref, b_ref, o_ref):
    """K-tiled reduction; the f32 output block itself is the accumulator."""
    k = pl.program_id(2)

    @pl.when(k == 0)
    def _():
        o_ref[...] = jnp.zeros_like(o_ref)

    x = x_ref[...].astype(jnp.bfloat16)          # no-op if already bf16
    o_ref[...] += jnp.dot(x, w_ref[...], preferred_element_type=jnp.float32)

    @pl.when(k == pl.num_programs(2) - 1)
    def _():
        o_ref[...] = jnp.maximum(o_ref[...] + b_ref[...], 0.0)


# ----------------------------- wrapper ---------------------------------------

def mylinear_forward(x, weight, bias, *,
                     tm_cap=None, tn_cap=None, tk_cap=None, vmem_budget=None):
    """relu(x @ weight + bias) as a tiled Pallas TPU kernel.

    x:      (..., in_units)    float32
    weight: (in_units, units)  float32 (cast to bf16 for the MXU)
    bias:   (units,)           float32
    returns (..., units)       float32
    """
    lead_shape = x.shape[:-1]
    in_units = x.shape[-1]
    in_units_w, units = weight.shape
    assert in_units == in_units_w, "weight shape mismatch"

    x2d = x.reshape(-1, in_units)
    B = x2d.shape[0]

    # ---- padded problem extents: 128-granular on K/N, 8-granular on M ------
    M_pad = _round_up(max(B, 1), 8)
    K_pad = _round_up(in_units, 128)
    N_pad = _round_up(units, 128)

    d_tm, d_tn, d_tk, d_budget, vmem_limit = _tile_config()
    tm_cap = d_tm if tm_cap is None else tm_cap
    tn_cap = d_tn if tn_cap is None else tn_cap
    tk_cap = d_tk if tk_cap is None else tk_cap
    vmem_budget = d_budget if vmem_budget is None else vmem_budget

    tm = _choose_tile(M_pad, tm_cap, 8)

    # Weight-resident fast path: if tk=K, tn=N fits the VMEM budget, the
    # reduction axis disappears (W loaded once, X streamed exactly once).
    if _vmem_footprint(tm, K_pad, N_pad, 4) <= vmem_budget:
        tk, tn = K_pad, N_pad
    else:
        tk = _choose_tile(K_pad, tk_cap, 128)
        tn = _choose_tile(N_pad, tn_cap, 128)

    ni, nj, nk = M_pad // tm, N_pad // tn, K_pad // tk

    # ---- operand preparation (skip no-op pads / casts) ----------------------
    # Wrapper-side bf16 cast of X costs an extra HBM pass over X; only worth
    # it when the kernel re-reads each X tile several times (nj >= 3).
    if nj >= 3:
        x2d = x2d.astype(jnp.bfloat16)
    if (M_pad != B) or (K_pad != in_units):
        x_p = jnp.pad(x2d, ((0, M_pad - B), (0, K_pad - in_units)))
    else:
        x_p = x2d

    # NOTE: for a real layer these two would be pre-cast/pre-padded once at
    # module init (static parameters), not per forward call.
    w_p = weight.astype(jnp.bfloat16)
    if (K_pad != in_units) or (N_pad != units):
        w_p = jnp.pad(w_p, ((0, K_pad - in_units), (0, N_pad - units)))
    b_p = bias.astype(jnp.float32).reshape(1, units)
    if N_pad != units:
        b_p = jnp.pad(b_p, ((0, 0), (0, N_pad - units)))

    # ---- megacore: mark only the axis whose duplicated operand is smaller ---
    x_stream_bytes = M_pad * K_pad * x_p.dtype.itemsize
    w_stream_bytes = K_pad * N_pad * 2
    if ni > 1 and (nj == 1 or w_stream_bytes <= x_stream_bytes):
        dim_sem = ("parallel", "arbitrary", "arbitrary")
    else:
        dim_sem = ("arbitrary", "parallel", "arbitrary")

    cp_kwargs = dict(dimension_semantics=dim_sem)
    if vmem_limit is not None:
        cp_kwargs["vmem_limit_bytes"] = vmem_limit

    kernel = _mylinear_kernel_single_k if nk == 1 else _mylinear_kernel_multi_k

    out = pl.pallas_call(
        kernel,
        out_shape=jax.ShapeDtypeStruct((M_pad, N_pad), jnp.float32),
        grid=(ni, nj, nk),
        in_specs=[
            pl.BlockSpec((tm, tk), lambda i, j, k: (i, k)),   # X tile
            pl.BlockSpec((tk, tn), lambda i, j, k: (k, j)),   # W tile
            pl.BlockSpec((1, tn), lambda i, j, k: (0, j)),    # bias tile
        ],
        out_specs=pl.BlockSpec((tm, tn), lambda i, j, k: (i, j)),
        compiler_params=pltpu.CompilerParams(**cp_kwargs),
    )(x_p, w_p, b_p)

    if (M_pad != B) or (N_pad != units):
        out = out[:B, :units]
    return out.reshape(*lead_shape, units)


# ------------------------------- demo ----------------------------------------

if __name__ == "__main__":
    key = jax.random.PRNGKey(0)

    def ref_bf16(x, w, b):
        x2 = x.reshape(-1, x.shape[-1])
        r = jnp.dot(x2.astype(jnp.bfloat16), w.astype(jnp.bfloat16),
                    preferred_element_type=jnp.float32) + b
        return jnp.maximum(r, 0.0).reshape(*x.shape[:-1], w.shape[-1])

    def ref_f32(x, w, b):
        return jnp.maximum(x @ w + b, 0.0)

    # --- module-shaped demo: X = (1, 1, 6, 8), in_units=8, units=16 ----------
    in_units, units = 8, 16
    kx, kw, kb = jax.random.split(key, 3)
    X = jax.random.uniform(kx, (1, 1, 6, in_units), dtype=jnp.float32)
    W = jax.random.uniform(kw, (in_units, units), dtype=jnp.float32)
    Bb = jax.random.uniform(kb, (units,), dtype=jnp.float32)

    out = jax.block_until_ready(mylinear_forward(X, W, Bb))
    assert out.shape == (1, 1, 6, units)
    assert jnp.allclose(out, ref_bf16(X, W, Bb), atol=1e-2, rtol=1e-3)
    assert jnp.allclose(out, ref_f32(X, W, Bb), atol=3e-2, rtol=2e-2)

    # --- weight-resident path with K/N padding (1500->1536, 320->384) --------
    B2, K2, N2 = 48, 1500, 320
    k2x, k2w, k2b = jax.random.split(jax.random.PRNGKey(1), 3)
    x2 = jax.random.uniform(k2x, (B2, K2), dtype=jnp.float32)
    w2 = jax.random.uniform(k2w, (K2, N2), dtype=jnp.float32)
    b2 = jax.random.uniform(k2b, (N2,), dtype=jnp.float32)
    out2 = jax.block_until_ready(mylinear_forward(x2, w2, b2))
    assert out2.shape == (B2, N2)
    assert jnp.allclose(out2, ref_bf16(x2, w2, b2), atol=5e-2, rtol=1e-3)
    assert jnp.allclose(out2, ref_f32(x2, w2, b2), rtol=2e-2, atol=1e-1)

    # --- force the multi-K (reduction) path with a tiny VMEM budget ----------
    B3, K3, N3 = 40, 1536, 384
    k3x, k3w, k3b = jax.random.split(jax.random.PRNGKey(2), 3)
    x3 = jax.random.uniform(k3x, (B3, K3), dtype=jnp.float32)
    w3 = jax.random.uniform(k3w, (K3, N3), dtype=jnp.float32)
    b3 = jax.random.uniform(k3b, (N3,), dtype=jnp.float32)
    out3 = jax.block_until_ready(
        mylinear_forward(x3, w3, b3, tk_cap=512, tn_cap=128,
                         vmem_budget=1 << 20))
    assert out3.shape == (B3, N3)
    assert jnp.allclose(out3, ref_bf16(x3, w3, b3), atol=5e-2, rtol=1e-3)
    assert jnp.allclose(out3, ref_f32(x3, w3, b3), rtol=2e-2, atol=1e-1)

    print("KERNEL_OK")
</pallas_src>

<mosaic_0001>
module attributes {stable_mosaic.version = 11 : i64} {
  func.func @_mylinear_kernel_single_k(%arg0: i32, %arg1: i32, %arg2: i32, %arg3: memref<8x128xf32, #tpu.memory_space<vmem>>, %arg4: memref<128x128xbf16, #tpu.memory_space<vmem>>, %arg5: memref<1x128xf32, #tpu.memory_space<vmem>>, %arg6: memref<8x128xf32, #tpu.memory_space<vmem>>) attributes {dimension_semantics = [#tpu.dimension_semantics<arbitrary>, #tpu.dimension_semantics<parallel>, #tpu.dimension_semantics<arbitrary>], iteration_bounds = array<i64: 1, 1, 1>, scalar_prefetch = 0 : i64, scratch_operands = 0 : i64, tpu.core_type = #tpu.core_type<tc>, window_params = [{transform_indices = @transform_0, window_bounds = array<i64: 8, 128>}, {transform_indices = @transform_1, window_bounds = array<i64: 128, 128>}, {transform_indices = @transform_2, window_bounds = array<i64: 1, 128>}, {transform_indices = @transform_3, window_bounds = array<i64: 8, 128>}]} {
    %c0 = arith.constant 0 : index
    %c0_0 = arith.constant 0 : index
    %0 = vector.load %arg3[%c0, %c0_0] : memref<8x128xf32, #tpu.memory_space<vmem>>, vector<8x128xf32>
    %1 = arith.truncf %0 : vector<8x128xf32> to vector<8x128xbf16>
    %c0_1 = arith.constant 0 : index
    %c0_2 = arith.constant 0 : index
    %2 = vector.load %arg4[%c0_1, %c0_2] : memref<128x128xbf16, #tpu.memory_space<vmem>>, vector<128x128xbf16>
    %cst = arith.constant dense<0.000000e+00> : vector<8x128xf32>
    %3 = tpu.matmul %1, %2, %cst {dimension_numbers = #tpu.dot_dimension_numbers<[1], [0], [0], [1], [0, 0, 1, 1], [], []>} : vector<8x128xbf16>, vector<128x128xbf16>, vector<8x128xf32> -> vector<8x128xf32>
    %c0_3 = arith.constant 0 : index
    %c0_4 = arith.constant 0 : index
    %4 = vector.load %arg5[%c0_3, %c0_4] : memref<1x128xf32, #tpu.memory_space<vmem>>, vector<1x128xf32>
    %5 = vector.broadcast %4 : vector<1x128xf32> to vector<8x128xf32>
    %6 = arith.addf %3, %5 : vector<8x128xf32>
    %cst_5 = arith.constant 0.000000e+00 : f32
    %7 = vector.broadcast %cst_5 : f32 to vector<8x128xf32>
    %8 = arith.maximumf %6, %7 : vector<8x128xf32>
    %c0_6 = arith.constant 0 : index
    %c0_7 = arith.constant 0 : index
    %9 = vector.load %arg6[%c0_6, %c0_7] : memref<8x128xf32, #tpu.memory_space<vmem>>, vector<8x128xf32>
    tpu.vector_store %arg6[%c0_6, %c0_7], %8 {strides = array<i32>} : memref<8x128xf32, #tpu.memory_space<vmem>>, vector<8x128xf32>,
    return
  }
  func.func @transform_0(%arg0: i32, %arg1: i32, %arg2: i32) -> (i32, i32) {
    %c0_i32 = arith.constant 0 : i32
    return %arg0, %arg2 : i32, i32
  }
  func.func @transform_1(%arg0: i32, %arg1: i32, %arg2: i32) -> (i32, i32) {
    %c0_i32 = arith.constant 0 : i32
    return %arg2, %arg1 : i32, i32
  }
  func.func @transform_2(%arg0: i32, %arg1: i32, %arg2: i32) -> (i32, i32) {
    %c0_i32 = arith.constant 0 : i32
    %c0_i32_0 = arith.constant 0 : i32
    return %c0_i32, %arg1 : i32, i32
  }
  func.func @transform_3(%arg0: i32, %arg1: i32, %arg2: i32) -> (i32, i32) {
    %c0_i32 = arith.constant 0 : i32
    return %arg0, %arg1 : i32, i32
  }
}

</mosaic_0001>

<llo_original>
// kernel: tpu_custom_call.1
$region0: #{tpu_custom_call.1}
  #allocation0 [shape = 'u32[]', space=smem, size = 0x4, offset = 0x4, fixed_abs, tag = 'smem constant byte address 0x4 - core index']
  #allocation1 [shape = 'u32[144,128]{1,0:T(1,128)}', space=vmem, size = 0x12000, scoped, tag = 'internal scratch']
  %s0 = inlined_call_operand.hbm [shape: f32[8,128], index: 0, kind: input, shape index: {}]
  %s1 = inlined_call_operand.hbm [shape: bf16[128,128], index: 1, kind: input, shape index: {}]
  %s2 = inlined_call_operand.vmem [shape: f32[1,128], index: 2, kind: input, shape index: {}]
  %s3 = inlined_call_operand.hbm [shape: f32[8,128], index: 3, kind: output, shape index: {}]
  %s4 = sld [smem:[#allocation0]]
  $region30: #{tpu_custom_call.1} parent=0
    _
  %s6 = ssub.s32 1, %s4
  %s7 = scalar_select 0, %s6, %s4
  $region1: #{tpu_custom_call.1} parent=0
    #allocation2 [shape = 'u8[4096]{0}', space=vmem, size = 0x1000, scoped, tag = 'input window, operand 0, single buffered']
    #allocation3 [shape = 's32[1]{0}', space=sflag, size = 0x4, scoped, tag = 'scoped memory for tpu_custom_call.1']
    #allocation4 [shape = 's32[1]{0}', space=sflag, size = 0x4, scoped, tag = 'scoped memory for tpu_custom_call.1']
    #allocation5 [shape = 'u8[32768]{0}', space=vmem, size = 0x8000, scoped, tag = 'input window, operand 1, single buffered']
    #allocation6 [shape = 's32[1]{0}', space=sflag, size = 0x4, scoped, tag = 'scoped memory for tpu_custom_call.1']
    #allocation7 [shape = 'u8[4096]{0}', space=vmem, size = 0x1000, scoped, tag = 'output window, operand 0, single buffered']
    %8 = vsyncpa [#allocation3], 0
    %9 = vsyncpa [#allocation6], 0
    %10 = vsyncpa [#allocation4], 0
    // Predicated region
    $region2: #{tpu_custom_call.1} parent=1 // pred_check
      _
    $region3: #{tpu_custom_call.1} parent=1 // pred_check_branch
      %12 = sbr.rel (0) target = $region5
    $region4: #{tpu_custom_call.1} parent=1 // pred_region
      %s14 = ssub.s32 128, 128
      %15 = vsyncadd [#allocation3], %s14
      %s17 = sshll.u32 [#allocation2], 4
      %s18 = int_to_ptr.vmem [resolvable:$true] %s17
      %20 = dma.hbm_to_vmem [thread:$0]  %s0, 128, %s18, [#allocation3]
    $region5: #{tpu_custom_call.1} parent=1 // pred_fallthru
      _
    // Predicated region
    $region6: #{tpu_custom_call.1} parent=1 // pred_check
      _
    $region7: #{tpu_custom_call.1} parent=1 // pred_check_branch
      %22 = sbr.rel (0) target = $region9
    $region8: #{tpu_custom_call.1} parent=1 // pred_region
      %s24 = ssub.s32 1024, 1024
      %25 = vsyncadd [#allocation6], %s24
      %s26 = sshll.u32 [#allocation5], 4
      %s27 = int_to_ptr.vmem [resolvable:$true] %s26
      %32 = dma.hbm_to_vmem [thread:$0]  %s1, 1024, %s27, [#allocation6], 64, 64, 4
    $region9: #{tpu_custom_call.1} parent=1 // pred_fallthru
      _
    // Predicated region
    $region10: #{tpu_custom_call.1} parent=1 // pred_check
      _
    $region11: #{tpu_custom_call.1} parent=1 // pred_check_branch
      %34 = sbr.rel (0) target = $region13
    $region12: #{tpu_custom_call.1} parent=1 // pred_region
      _
    $region13: #{tpu_custom_call.1} parent=1 // pred_fallthru
      _
    // Predicated region
    $region14: #{tpu_custom_call.1} parent=1 // pred_check
      _
    $region15: #{tpu_custom_call.1} parent=1 // pred_check_branch
      %36 = sbr.rel (0) target = $region17
    $region16: #{tpu_custom_call.1} parent=1 // pred_region
      %37 = dma.done [#allocation3], 128
    $region17: #{tpu_custom_call.1} parent=1 // pred_fallthru
      _
    // Predicated region
    $region18: #{tpu_custom_call.1} parent=1 // pred_check
      _
    $region19: #{tpu_custom_call.1} parent=1 // pred_check_branch
      %39 = sbr.rel (0) target = $region21
    $region20: #{tpu_custom_call.1} parent=1 // pred_region
      %40 = dma.done [#allocation6], 1024
    $region21: #{tpu_custom_call.1} parent=1 // pred_fallthru
      _
    %v42 = vld [vmem:[#allocation2] sm:$0xff]
    %v43 = vpack.c.bf16 %v42, %v42
    %v44 = vld [vmem:[#allocation5] sm:$0xf]
    %v45 = vld [vmem:[#allocation5 + $0x4] sm:$0xf]
    %v46 = vld [vmem:[#allocation5 + $0x8] sm:$0xf]
    %v47 = vld [vmem:[#allocation5 + $0xc] sm:$0xf]
    %v48 = vld [vmem:[#allocation5 + $0x10] sm:$0xf]
    %v49 = vld [vmem:[#allocation5 + $0x14] sm:$0xf]
    %v50 = vld [vmem:[#allocation5 + $0x18] sm:$0xf]
    %v51 = vld [vmem:[#allocation5 + $0x1c] sm:$0xf]
    %v52 = vld [vmem:[#allocation5 + $0x20] sm:$0xf]
    %v53 = vld [vmem:[#allocation5 + $0x24] sm:$0xf]
    %v54 = vld [vmem:[#allocation5 + $0x28] sm:$0xf]
    %v55 = vld [vmem:[#allocation5 + $0x2c] sm:$0xf]
    %v56 = vld [vmem:[#allocation5 + $0x30] sm:$0xf]
    %v57 = vld [vmem:[#allocation5 + $0x34] sm:$0xf]
    %v58 = vld [vmem:[#allocation5 + $0x38] sm:$0xf]
    %v59 = vld [vmem:[#allocation5 + $0x3c] sm:$0xf]
    %v60 = vld [vmem:[%s2] sm:$0x1]
    %v62 = vlaneseq
    %v63 = vshrl.u32 %v62, 7
    %v64 = vsub.s32 0, %v63
    %v65 = vrot.slane %v60, %v64
    %v83 = vunpack.c.l.b16 %v44
    %v84 = vunpack.c.l.b16 %v45
    %v85 = vunpack.c.l.b16 %v46
    %v86 = vunpack.c.l.b16 %v47
    %v87 = vunpack.c.l.b16 %v48
    %v88 = vunpack.c.l.b16 %v49
    %v89 = vunpack.c.l.b16 %v50
    %v90 = vunpack.c.l.b16 %v51
    %v91 = vunpack.c.l.b16 %v52
    %v92 = vunpack.c.l.b16 %v53
    %v93 = vunpack.c.l.b16 %v54
    %v94 = vunpack.c.l.b16 %v55
    %v95 = vunpack.c.l.b16 %v56
    %v96 = vunpack.c.l.b16 %v57
    %v97 = vunpack.c.l.b16 %v58
    %v98 = vunpack.c.l.b16 %v59
    %v99 = vpack.c.b16 %v84, %v83
    %v100 = vpack.c.b16 %v86, %v85
    %v101 = vpack.c.b16 %v88, %v87
    %v102 = vpack.c.b16 %v90, %v89
    %v103 = vpack.c.b16 %v92, %v91
    %v104 = vpack.c.b16 %v94, %v93
    %v105 = vpack.c.b16 %v96, %v95
    %v106 = vpack.c.b16 %v98, %v97
    %115 = vmatprep.subr.bf16.mxu0 0
    %116 = vmatpush1.bf16.msra.mxu0 %v106
    %117 = vmatprep.subr.bf16.mxu0 0
    %118 = vmatpush1.bf16.msra.mxu0 %v105
    %119 = vmatprep.subr.bf16.mxu0 0
    %120 = vmatpush1.bf16.msra.mxu0 %v104
    %121 = vmatprep.subr.bf16.mxu0 0
    %122 = vmatpush1.bf16.msra.mxu0 %v103
    %123 = vmatprep.subr.bf16.mxu0 0
    %124 = vmatpush1.bf16.msra.mxu0 %v102
    %125 = vmatprep.subr.bf16.mxu0 0
    %126 = vmatpush1.bf16.msra.mxu0 %v101
    %127 = vmatprep.subr.bf16.mxu0 0
    %128 = vmatpush1.bf16.msra.mxu0 %v100
    %129 = vmatprep.subr.bf16.mxu0 0
    %130 = vmatpush1.bf16.msra.mxu0 %v99
    %131 = vmatprep.subr.bf16.mxu0 0
    %132 = vmatpush2.bf16.msra.mxu0 0
    %133 = vmatprep.subr.bf16.mxu0 0
    %134 = vmatpush2.bf16.msra.mxu0 0
    %135 = vmatprep.subr.bf16.mxu0 0
    %136 = vmatpush2.bf16.msra.mxu0 0
    %137 = vmatprep.subr.bf16.mxu0 0
    %138 = vmatpush2.bf16.msra.mxu0 0
    %139 = vmatprep.subr.bf16.mxu0 0
    %140 = vmatpush2.bf16.msra.mxu0 0
    %141 = vmatprep.subr.bf16.mxu0 0
    %142 = vmatpush2.bf16.msra.mxu0 0
    %143 = vmatprep.subr.bf16.mxu0 0
    %144 = vmatpush2.bf16.msra.mxu0 0
    %145 = vmatprep.subr.bf16.mxu0 0
    %146 = vmatpush2.bf16.msra.mxu0 0
    %147 = vmatprep.mubr.bf16.mxu0 0
    %148 = vmatmul.mubr.bf16.gmra.mxu0 %v43
    %v149 = vpop.f32.mrf.mxu0
    %v150 = vadd.f32 %v65, %v149
    %v151 = vpop.f32.mrf.mxu0
    %v152 = vpop.f32.mrf.mxu0
    %v153 = vpop.f32.mrf.mxu0
    %154 = vdwg.mxu0
    %v155 = vmax.f32 %v150, 0.0
    %156 = vst [vmem:[#allocation7] sm:$0xff] %v155
    // Predicated region
    $region22: #{tpu_custom_call.1} parent=1 // pred_check
      _
    $region23: #{tpu_custom_call.1} parent=1 // pred_check_branch
      %158 = sbr.rel (0) target = $region25
    $region24: #{tpu_custom_call.1} parent=1 // pred_region
      %s160 = ssub.s32 128, 128
      %161 = vsyncadd [#allocation4], %s160
      %s163 = sshll.u32 [#allocation7], 4
      %s164 = int_to_ptr.vmem [resolvable:$true] %s163
      %166 = dma.vmem_to_hbm [thread:$0]  %s164, 128, %s3, [#allocation4]
    $region25: #{tpu_custom_call.1} parent=1 // pred_fallthru
      _
    // Predicated region
    $region26: #{tpu_custom_call.1} parent=1 // pred_check
      _
    $region27: #{tpu_custom_call.1} parent=1 // pred_check_branch
      %168 = sbr.rel (0) target = $region29
    $region28: #{tpu_custom_call.1} parent=1 // pred_region
      %169 = dma.done [#allocation4], 128
    $region29: #{tpu_custom_call.1} parent=1 // pred_fallthru
      _
    %170 = vsyncpa [#allocation3], 1
    %171 = vsyncpa [#allocation6], 1
    %172 = vsyncpa [#allocation4], 1

</llo_original>
